<compile_context>
chip_gen: v5e
topology: v5e:2x2
jax: 0.10.0
libtpu: 0.0.40
codegen_flags: <defaults>
</compile_context>

<pallas_src>
import functools

import numpy as np
import jax
import jax.numpy as jnp
from jax.experimental import pallas as pl
from jax.experimental.pallas import tpu as pltpu

EPS_NORMALIZE = 1e-12    # torch.nn.functional.normalize default eps
LN_EPS = 1e-5            # torch.nn.LayerNorm default eps
MXU_DTYPE = jnp.bfloat16  # MXU operand dtype (accumulation stays f32)


def _round_up(a, m):
    return ((a + m - 1) // m) * m


# ----------------------------------------------------------------------------
# Pallas kernels
# ----------------------------------------------------------------------------
def _linear_kernel(x_ref, w_ref, b_ref, o_ref):
    # y = x @ W + b ; x arrives f32 and is cast to bf16 on the fly, W is bf16,
    # accumulation f32, output bf16 (halves write traffic for all consumers).
    y = jnp.dot(x_ref[...].astype(MXU_DTYPE), w_ref[...],
                preferred_element_type=jnp.float32)
    o_ref[...] = (y + b_ref[...]).astype(o_ref.dtype)


def linear_pallas(x2d, w, b, *, tile_m=512, out_dtype=jnp.bfloat16):
    """Tiled (over M) dense projection. f32 activations in, bf16 out."""
    M, K = x2d.shape
    O = w.shape[1]
    tm = min(tile_m, _round_up(M, 8))
    Mp = _round_up(M, tm)
    if Mp != M:
        x2d = jnp.pad(x2d, ((0, Mp - M), (0, 0)))
    out = pl.pallas_call(
        _linear_kernel,
        out_shape=jax.ShapeDtypeStruct((Mp, O), out_dtype),
        grid=(Mp // tm,),
        in_specs=[
            pl.BlockSpec((tm, K), lambda i: (i, 0)),
            pl.BlockSpec((K, O), lambda i: (0, 0)),
            pl.BlockSpec((1, O), lambda i: (0, 0)),
        ],
        out_specs=pl.BlockSpec((tm, O), lambda i: (i, 0)),
        compiler_params=pltpu.CompilerParams(
            dimension_semantics=("parallel",),
            vmem_limit_bytes=48 * 1024 * 1024),
    )(x2d, w.astype(MXU_DTYPE), b.reshape(1, O).astype(jnp.float32))
    return out[:M]


def _proj_nc_kernel(x_ref, w_ref, b_ref, o_ref):
    # Output projection in channel-major layout: x block is (C, TN) bf16,
    # result tile is (TN, C_out) f32.  The relayout happens in-VMEM (f32
    # transpose) instead of as a full HBM pass.
    xt = jnp.transpose(x_ref[0].astype(jnp.float32))            # (TN, C)
    y = jnp.dot(xt.astype(MXU_DTYPE), w_ref[...],
                preferred_element_type=jnp.float32) + b_ref[...]
    o_ref[0] = y.astype(o_ref.dtype)


def proj_nc_pallas(x_cn, w, b, *, tile_n=512):
    """y[b, n, :] = x_cn[b, :, n] @ W + b_out, consuming (B, C, N) input."""
    B, C, N = x_cn.shape
    O = w.shape[1]
    tn = N
    if N % 128 == 0:
        t = min(tile_n, N)
        t -= t % 128
        while t >= 128 and N % t != 0:
            t -= 128
        if t >= 128:
            tn = t
    return pl.pallas_call(
        _proj_nc_kernel,
        out_shape=jax.ShapeDtypeStruct((B, N, O), jnp.float32),
        grid=(B, N // tn),
        in_specs=[
            pl.BlockSpec((1, C, tn), lambda bi, ni: (bi, 0, ni)),
            pl.BlockSpec((C, O), lambda bi, ni: (0, 0)),
            pl.BlockSpec((1, O), lambda bi, ni: (0, 0)),
        ],
        out_specs=pl.BlockSpec((1, tn, O), lambda bi, ni: (bi, ni, 0)),
        compiler_params=pltpu.CompilerParams(
            dimension_semantics=("parallel", "parallel"),
            vmem_limit_bytes=48 * 1024 * 1024),
    )(x_cn, w.astype(MXU_DTYPE), b.reshape(1, O).astype(jnp.float32))


def _agg_attn_kernel(q_ref, qe_ref, scale_ref, iscale_ref, kpad_ref, vpad_ref,
                     kp_ref, vp_ref, pb_ref, ltT_ref, rlb_ref, lbe_ref,
                     mask_ref, out_ref, *, img_w, pad):
    """One (head, batch) slice.  Everything is laid out with N on lanes."""
    h = pl.program_id(0)
    q = q_ref[0].astype(jnp.float32)                      # (hd, N)
    hd, N = q.shape
    P = kp_ref.shape[1]
    off = pad * (img_w + 1)                               # halo of the flat pad
    shifts = [dy * img_w + dx
              for dy in range(-pad, pad + 1) for dx in range(-pad, pad + 1)]
    eps2 = EPS_NORMALIZE * EPS_NORMALIZE

    # --- q: L2 normalize over hd (EUP rsqrt), add query embedding, apply
    #     softplus(temperature) * seq_length_scale (folded on host).
    qn = q * jax.lax.rsqrt(
        jnp.maximum(jnp.sum(q * q, axis=0, keepdims=True), eps2))
    q_scaled = (qn + qe_ref[0]) * scale_ref[0]            # (hd, N)

    # --- k (zero-padded flat image): upcast + in-kernel L2 normalization.
    #     Zero halo columns stay exactly zero (0 * finite rsqrt).
    kpad = kpad_ref[0].astype(jnp.float32)                # (hd, Npad)
    knorm = kpad * jax.lax.rsqrt(
        jnp.maximum(jnp.sum(kpad * kpad, axis=0, keepdims=True), eps2))

    # --- pooled k: in-kernel L2 normalization.
    kp = kp_ref[0].astype(jnp.float32)                    # (P, hd)
    kpn = kp * jax.lax.rsqrt(
        jnp.maximum(jnp.sum(kp * kp, axis=-1, keepdims=True), eps2))

    # --- single MXU call: [k_pool_norm ; learnable_tokens^T] @ q_scaled
    lhs = jnp.concatenate([kpn.astype(MXU_DTYPE), ltT_ref[0]], axis=0)
    comb = jnp.dot(lhs, q_scaled.astype(MXU_DTYPE),
                   preferred_element_type=jnp.float32)     # (P + L, N)
    attn_pool = comb[:P] + pb_ref[0]                       # (P, N)

    # --- local logits: 9 separate (1, N) rows from shifted slices of knorm
    rows = []
    for i, s in enumerate(shifts):
        k_s = knorm[:, off + s: off + s + N]               # (hd, N)
        rows.append(jnp.sum(q_scaled * k_s, axis=0, keepdims=True)
                    + rlb_ref[h, i])

    # --- joint softmax over [local rows || pool]; masked local entries are
    #     excluded via the {0,1} validity row (same denominator as -inf fill).
    m = jnp.max(attn_pool, axis=0, keepdims=True)          # (1, N)
    for r in rows:
        m = jnp.maximum(m, r)
    ep = jnp.exp(attn_pool - m)                            # (P, N)
    denom = jnp.sum(ep, axis=0, keepdims=True)
    e_rows = []
    for i, r in enumerate(rows):
        e = jnp.exp(r - m) * mask_ref[i:i + 1, :]
        e_rows.append(e)
        denom = denom + e
    inv = pl.reciprocal(denom, approx=True)                # (1, N)

    # --- outputs: local (shift-sliced weighted v) + pooled (MXU)
    vpad = vpad_ref[0].astype(jnp.float32)                 # (hd, Npad)
    iscale = iscale_ref[0]                                 # (1, N)
    acc = jnp.zeros_like(q)
    for i, s in enumerate(shifts):
        v_s = vpad[:, off + s: off + s + N]                # (hd, N)
        # (learnable_tokens^T @ q_norm)_i + learnable_bias_i, recovered from
        # the merged matmul via inv_scale and the host-folded lb_eff.
        tok = comb[P + i: P + i + 1, :] * iscale + lbe_ref[h, i]
        t_row = (tok + e_rows[i] * inv) * mask_ref[i:i + 1, :]
        acc = acc + t_row * v_s
    xp = jnp.dot(vp_ref[0], (ep * inv).astype(MXU_DTYPE),
                 preferred_element_type=jnp.float32)       # (hd, N)
    out_ref[0] = (acc + xp).astype(out_ref.dtype)


def aggregated_attention_core(q, qe, scale, inv_scale, k_pad, v_pad, k_pool,
                              v_pool, pool_bias, ltT, rlb, lb_eff, mask_valid,
                              *, B, nh, N, hd, L, P, W_img, pad):
    Npad = N + 2 * pad * (W_img + 1)
    kernel = functools.partial(_agg_attn_kernel, img_w=W_img, pad=pad)
    return pl.pallas_call(
        kernel,
        out_shape=jax.ShapeDtypeStruct((B * nh, hd, N), jnp.bfloat16),
        grid=(nh, B),   # head-outer: per-head blocks reused across the batch loop
        in_specs=[
            pl.BlockSpec((1, hd, N),    lambda h, b: (b * nh + h, 0, 0)),
            pl.BlockSpec((1, hd, 1),    lambda h, b: (h, 0, 0)),
            pl.BlockSpec((1, 1, N),     lambda h, b: (h, 0, 0)),
            pl.BlockSpec((1, 1, N),     lambda h, b: (h, 0, 0)),
            pl.BlockSpec((1, hd, Npad), lambda h, b: (b * nh + h, 0, 0)),
            pl.BlockSpec((1, hd, Npad), lambda h, b: (b * nh + h, 0, 0)),
            pl.BlockSpec((1, P, hd),    lambda h, b: (b * nh + h, 0, 0)),
            pl.BlockSpec((1, hd, P),    lambda h, b: (b * nh + h, 0, 0)),
            pl.BlockSpec((1, P, N),     lambda h, b: (h, 0, 0)),
            pl.BlockSpec((1, L, hd),    lambda h, b: (h, 0, 0)),
            pl.BlockSpec(memory_space=pltpu.MemorySpace.SMEM),   # rlb (nh, L)
            pl.BlockSpec(memory_space=pltpu.MemorySpace.SMEM),   # lb_eff (nh, L)
            pl.BlockSpec((L, N),        lambda h, b: (0, 0)),
        ],
        out_specs=pl.BlockSpec((1, hd, N), lambda h, b: (b * nh + h, 0, 0)),
        compiler_params=pltpu.CompilerParams(
            dimension_semantics=("parallel", "parallel"),
            vmem_limit_bytes=48 * 1024 * 1024),
    )(q, qe, scale, inv_scale, k_pad, v_pad, k_pool, v_pool, pool_bias,
      ltT, rlb, lb_eff, mask_valid)


# ----------------------------------------------------------------------------
# Plain-JAX glue (tiny ops / data movement with no clean Pallas equivalent)
# ----------------------------------------------------------------------------
def unfold_nchw(img, ws):
    """nn.Unfold(kernel_size=ws, padding=ws//2, stride=1):
    (B, C, H, W) -> (B, C, ws*ws, H*W).  Harness mask construction only."""
    B, C, H, W = img.shape
    pad = ws // 2
    p = jnp.pad(img, ((0, 0), (0, 0), (pad, pad), (pad, pad)))
    pats = [p[:, :, i:i + H, j:j + W] for i in range(ws) for j in range(ws)]
    return jnp.stack(pats, axis=2).reshape(B, C, ws * ws, H * W)


def bilinear_resize(x, oh, ow):
    """F.interpolate(mode='bilinear', align_corners=False) for NCHW."""
    b, c, ih, iw = x.shape
    if (ih, iw) == (oh, ow):
        return x

    def src_idx(out_size, in_size):
        i = jnp.arange(out_size, dtype=jnp.float32)
        s = jnp.maximum((i + 0.5) * (in_size / out_size) - 0.5, 0.0)
        lo = jnp.floor(s)
        w = s - lo
        lo = lo.astype(jnp.int32)
        hi = jnp.minimum(lo + 1, in_size - 1)
        return lo, hi, w

    y0, y1, wy = src_idx(oh, ih)
    x0, x1, wx = src_idx(ow, iw)
    top = (x[:, :, y0, :] * (1.0 - wy)[None, None, :, None]
           + x[:, :, y1, :] * wy[None, None, :, None])
    return top[:, :, :, x0] * (1.0 - wx) + top[:, :, :, x1] * wx


def aggregated_attention_forward(params, x, H, W, relative_pos_index,
                                 relative_coords_table, seq_length_scale,
                                 padding_mask, *, num_heads, window_size,
                                 sr_ratio, trained_resolution):
    B, N, C = x.shape
    nh = num_heads
    hd = C // nh
    ws = window_size
    pad = ws // 2
    L = ws * ws
    assert H % sr_ratio == 0 and W % sr_ratio == 0
    pool_H, pool_W = H // sr_ratio, W // sr_ratio
    P = pool_H * pool_W
    tH, tW = trained_resolution
    tpH, tpW = tH // sr_ratio, tW // sr_ratio

    xf = x.reshape(B * N, C)

    # ---- fused q / kv / sr projection: one MXU matmul, x read from HBM once,
    #      bf16 output (all consumers are bf16).
    w_fused = jnp.concatenate([params["Wq"], params["Wkv"], params["Wsr"]], axis=1)
    b_fused = jnp.concatenate([params["bq"], params["bkv"], params["bsr"]])
    y = linear_pallas(xf, w_fused, b_fused).reshape(B, N, 4 * C)
    q_proj = y[..., :C]
    k_proj = y[..., C:2 * C]
    v_proj = y[..., 2 * C:3 * C]
    sr_out = y[..., 3 * C:]

    # q / k / v in (B*nh, hd, N) bf16 with N on lanes (k is normalized in-kernel)
    q = q_proj.reshape(B, N, nh, hd).transpose(0, 2, 3, 1).reshape(B * nh, hd, N)
    k_flat = k_proj.reshape(B, N, nh, hd).transpose(0, 2, 3, 1).reshape(B * nh, hd, N)
    v_flat = v_proj.reshape(B, N, nh, hd).transpose(0, 2, 3, 1).reshape(B * nh, hd, N)
    off = pad * (W + 1)
    k_pad = jnp.pad(k_flat, ((0, 0), (0, 0), (off, off)))
    v_pad = jnp.pad(v_flat, ((0, 0), (0, 0), (off, off)))

    # ---- pooled kv: GELU -> avg pool -> LayerNorm(f32) -> kv projection
    sr_act = jax.nn.gelu(sr_out, approximate=False)
    pooled = sr_act.reshape(B, pool_H, sr_ratio, pool_W, sr_ratio, C).mean(
        axis=(2, 4), dtype=jnp.float32).reshape(B, P, C)
    mean = pooled.mean(axis=-1, keepdims=True)
    var = jnp.mean((pooled - mean) ** 2, axis=-1, keepdims=True)
    pooled = ((pooled - mean) * jax.lax.rsqrt(var + LN_EPS)
              * params["ln_g"] + params["ln_b"])
    kvp = linear_pallas(pooled.reshape(B * P, C),
                        params["Wkv"], params["bkv"]).reshape(B, P, 2 * C)
    k_pool = (kvp[..., :C].reshape(B, P, nh, hd)
              .transpose(0, 2, 1, 3).reshape(B * nh, P, hd))
    v_pool = (kvp[..., C:].reshape(B, P, nh, hd)
              .transpose(0, 2, 3, 1).reshape(B * nh, hd, P))

    # ---- continuous position bias (tiny MLP + gather + bilinear interp: glue)
    h1 = jax.nn.relu(relative_coords_table @ params["W_cpb1"] + params["b_cpb1"])
    cpb = h1 @ params["W_cpb2"] + params["b_cpb2"]          # (Lt, nh)
    bias_table = cpb.T                                      # (nh, Lt)
    pb = jnp.take(bias_table, relative_pos_index.reshape(-1), axis=1)
    pb = pb.reshape(nh, tH * tW, tpH, tpW)
    pb = bilinear_resize(pb, pool_H, pool_W)
    pb = pb.reshape(nh, tH * tW, P).transpose(0, 2, 1).reshape(nh, P, tH, tW)
    pb = bilinear_resize(pb, H, W)
    pool_bias = pb.reshape(nh, P, N)                        # (nh, P, N) f32

    # ---- host-folded scalars / masks
    scale = (jax.nn.softplus(params["temperature"]).reshape(nh, 1, 1)
             * seq_length_scale.reshape(1, 1, N).astype(jnp.float32))     # (nh,1,N)
    inv_scale = 1.0 / scale                                               # (nh,1,N)
    qe = params["query_embedding"].reshape(nh, 1, hd).transpose(0, 2, 1)  # (nh,hd,1)
    ltT_f32 = params["learnable_tokens"].transpose(0, 2, 1)               # (nh,L,hd)
    ltT = ltT_f32.astype(MXU_DTYPE)
    lt_qe = jnp.sum(ltT_f32 * params["query_embedding"], axis=-1)         # (nh,L)
    lb_eff = params["learnable_bias"].reshape(nh, L) - lt_qe              # (nh,L)
    rlb = params["rel_pos_bias_local"]                                    # (nh,L)

    mask_valid = 1.0 - padding_mask.astype(jnp.float32).T                 # (L,N) {0,1}

    # ---- core attention kernel (Pallas)
    out = aggregated_attention_core(
        q, qe, scale, inv_scale, k_pad, v_pad, k_pool, v_pool, pool_bias,
        ltT, rlb, lb_eff, mask_valid,
        B=B, nh=nh, N=N, hd=hd, L=L, P=P, W_img=W, pad=pad)

    # ---- output projection directly from the channel-major attention output
    out_cn = out.reshape(B, C, N)      # free reshape of (B*nh, hd, N)
    return proj_nc_pallas(out_cn, params["Wproj"], params["bproj"])


# ----------------------------------------------------------------------------
# Deterministic parameter / input construction
# ----------------------------------------------------------------------------
def init_params(key, dim, num_heads, window_size):
    hd = dim // num_heads
    L = window_size ** 2
    ks = jax.random.split(key, 10)

    def tn(k, shape, std):
        return (std * jax.random.truncated_normal(k, -2.0, 2.0, shape)).astype(jnp.float32)

    p = {}
    p["Wq"] = tn(ks[0], (dim, dim), 0.02)
    p["bq"] = jnp.zeros((dim,), jnp.float32)
    p["Wkv"] = tn(ks[1], (dim, 2 * dim), 0.02)
    p["bkv"] = jnp.zeros((2 * dim,), jnp.float32)
    p["Wsr"] = tn(ks[2], (dim, dim), 0.02)          # 1x1 conv == pointwise linear
    p["bsr"] = jnp.zeros((dim,), jnp.float32)
    p["ln_g"] = jnp.ones((dim,), jnp.float32)
    p["ln_b"] = jnp.zeros((dim,), jnp.float32)
    p["W_cpb1"] = tn(ks[3], (2, 512), 0.02)
    p["b_cpb1"] = jnp.zeros((512,), jnp.float32)
    p["W_cpb2"] = tn(ks[4], (512, num_heads), 0.02)
    p["b_cpb2"] = jnp.zeros((num_heads,), jnp.float32)
    p["Wproj"] = tn(ks[5], (dim, dim), 0.02)
    p["bproj"] = jnp.zeros((dim,), jnp.float32)
    p["temperature"] = jnp.log(jnp.exp(jnp.ones((num_heads, 1, 1), jnp.float32) / 0.24) - 1.0)
    p["query_embedding"] = tn(ks[6], (num_heads, 1, hd), 0.02)
    p["rel_pos_bias_local"] = tn(ks[7], (num_heads, L), 0.0004)
    p["learnable_tokens"] = tn(ks[8], (num_heads, hd, L), 0.02)
    p["learnable_bias"] = jnp.zeros((num_heads, 1, L), jnp.float32)
    return p


def build_relative_position_cpb(query_size, key_size, pretrain_size):
    qH, qW = query_size
    kH, kW = key_size
    axis_qh = np.arange(qH, dtype=np.float64)
    axis_qw = np.arange(qW, dtype=np.float64)
    axis_kh = axis_qh.reshape(kH, qH // kH).mean(axis=1)
    axis_kw = axis_qw.reshape(kW, qW // kW).mean(axis=1)
    qh, qw = np.meshgrid(axis_qh, axis_qw, indexing="ij")
    kh, kw = np.meshgrid(axis_kh, axis_kw, indexing="ij")
    rel_h = (qh.reshape(-1)[:, None] - kh.reshape(-1)[None, :]) / (pretrain_size[0] - 1) * 8
    rel_w = (qw.reshape(-1)[:, None] - kw.reshape(-1)[None, :]) / (pretrain_size[1] - 1) * 8
    rel_hw = np.round(np.stack([rel_h, rel_w], axis=-1).reshape(-1, 2), 6)
    table, idx = np.unique(rel_hw, return_inverse=True, axis=0)
    table = np.sign(table) * np.log2(np.abs(table) + 1.0) / np.log2(8)
    return (jnp.asarray(table, dtype=jnp.float32),
            jnp.asarray(np.asarray(idx).reshape(qH * qW, kH * kW), dtype=jnp.int32))


if __name__ == "__main__":
    B, C, H, W = 2, 32, 8, 8
    num_heads, window_size, sr_ratio = 4, 3, 2
    N = H * W
    pool_len = (H // sr_ratio) * (W // sr_ratio)

    key = jax.random.PRNGKey(0)
    k_params, k_x = jax.random.split(key)
    params = init_params(k_params, C, num_heads, window_size)
    x = jax.random.normal(k_x, (B, N, C), jnp.float32)

    relative_coords_table, relative_pos_index = build_relative_position_cpb(
        (H, W), (H // sr_ratio, W // sr_ratio), (H, W))

    # padding mask + per-position sequence-length scale (as in TransNeXt)
    unf_ones = unfold_nchw(jnp.ones((1, 1, H, W), jnp.float32), window_size)[0, 0]  # (L, N)
    padding_mask = (unf_ones == 0).T                                                # (N, L) bool
    local_counts = unf_ones.sum(axis=0)                                             # (N,)
    seq_length_scale = jnp.log(local_counts + pool_len).reshape(N, 1)

    fwd = functools.partial(
        aggregated_attention_forward,
        num_heads=num_heads, window_size=window_size, sr_ratio=sr_ratio,
        trained_resolution=(H, W))

    out = fwd(params, x, H, W, relative_pos_index, relative_coords_table,
              seq_length_scale, padding_mask)
    out = jax.block_until_ready(out)
    assert out.shape == (B, N, C)
    assert bool(jnp.all(jnp.isfinite(out)))
    print("KERNEL_OK")
</pallas_src>

<mosaic_0001>
module attributes {stable_mosaic.version = 11 : i64} {
  func.func @_linear_kernel(%arg0: i32, %arg1: memref<128x32xf32, #tpu.memory_space<vmem>>, %arg2: memref<32x128xbf16, #tpu.memory_space<vmem>>, %arg3: memref<1x128xf32, #tpu.memory_space<vmem>>, %arg4: memref<128x128xbf16, #tpu.memory_space<vmem>>) attributes {dimension_semantics = [#tpu.dimension_semantics<parallel>], iteration_bounds = array<i64: 1>, scalar_prefetch = 0 : i64, scratch_operands = 0 : i64, tpu.core_type = #tpu.core_type<tc>, window_params = [{transform_indices = @transform_0, window_bounds = array<i64: 128, 32>}, {pipeline_mode = #tpu.pipeline_mode<synchronous>, transform_indices = @transform_1, window_bounds = array<i64: 32, 128>}, {pipeline_mode = #tpu.pipeline_mode<synchronous>, transform_indices = @transform_2, window_bounds = array<i64: 1, 128>}, {transform_indices = @transform_3, window_bounds = array<i64: 128, 128>}]} {
    %c0 = arith.constant 0 : index
    %c0_0 = arith.constant 0 : index
    %0 = vector.load %arg1[%c0, %c0_0] : memref<128x32xf32, #tpu.memory_space<vmem>>, vector<128x32xf32>
    %1 = arith.truncf %0 : vector<128x32xf32> to vector<128x32xbf16>
    %c0_1 = arith.constant 0 : index
    %c0_2 = arith.constant 0 : index
    %2 = vector.load %arg2[%c0_1, %c0_2] : memref<32x128xbf16, #tpu.memory_space<vmem>>, vector<32x128xbf16>
    %cst = arith.constant dense<0.000000e+00> : vector<128x128xf32>
    %3 = tpu.matmul %1, %2, %cst {dimension_numbers = #tpu.dot_dimension_numbers<[1], [0], [0], [1], [0, 0, 1, 1], [], []>} : vector<128x32xbf16>, vector<32x128xbf16>, vector<128x128xf32> -> vector<128x128xf32>
    %c0_3 = arith.constant 0 : index
    %c0_4 = arith.constant 0 : index
    %4 = vector.load %arg3[%c0_3, %c0_4] : memref<1x128xf32, #tpu.memory_space<vmem>>, vector<1x128xf32>
    %5 = vector.broadcast %4 : vector<1x128xf32> to vector<128x128xf32>
    %6 = arith.addf %3, %5 : vector<128x128xf32>
    %7 = arith.truncf %6 : vector<128x128xf32> to vector<128x128xbf16>
    %c0_5 = arith.constant 0 : index
    %c0_6 = arith.constant 0 : index
    %8 = vector.load %arg4[%c0_5, %c0_6] : memref<128x128xbf16, #tpu.memory_space<vmem>>, vector<128x128xbf16>
    tpu.vector_store %arg4[%c0_5, %c0_6], %7 {strides = array<i32>} : memref<128x128xbf16, #tpu.memory_space<vmem>>, vector<128x128xbf16>,
    return
  }
  func.func @transform_0(%arg0: i32) -> (i32, i32) {
    %c0_i32 = arith.constant 0 : i32
    %c0_i32_0 = arith.constant 0 : i32
    return %arg0, %c0_i32 : i32, i32
  }
  func.func @transform_1(%arg0: i32) -> (i32, i32) {
    %c0_i32 = arith.constant 0 : i32
    %c0_i32_0 = arith.constant 0 : i32
    %c0_i32_1 = arith.constant 0 : i32
    return %c0_i32, %c0_i32_0 : i32, i32
  }
  func.func @transform_2(%arg0: i32) -> (i32, i32) {
    %c0_i32 = arith.constant 0 : i32
    %c0_i32_0 = arith.constant 0 : i32
    %c0_i32_1 = arith.constant 0 : i32
    return %c0_i32, %c0_i32_0 : i32, i32
  }
  func.func @transform_3(%arg0: i32) -> (i32, i32) {
    %c0_i32 = arith.constant 0 : i32
    %c0_i32_0 = arith.constant 0 : i32
    return %arg0, %c0_i32 : i32, i32
  }
}

</mosaic_0001>

<llo_original>
// kernel: tpu_custom_call.1
$region0: #{tpu_custom_call.1}
  #allocation0 [shape = 'u32[]', space=smem, size = 0x4, offset = 0x4, fixed_abs, tag = 'smem constant byte address 0x4 - core index']
  #allocation1 [shape = 'u32[72,128]{1,0:T(1,128)}', space=vmem, size = 0x9000, scoped, tag = 'internal scratch']
  %s0 = inlined_call_operand.vmem [shape: f32[128,32], index: 0, kind: input, shape index: {}]
  %s1 = inlined_call_operand.vmem [shape: bf16[32,128], index: 1, kind: input, shape index: {}]
  %s2 = inlined_call_operand.vmem [shape: f32[1,128], index: 2, kind: input, shape index: {}]
  %s3 = inlined_call_operand.hbm [shape: bf16[128,128], index: 3, kind: output, shape index: {}]
  %s4 = sld [smem:[#allocation0]]
  $region22: #{tpu_custom_call.1} parent=0
    _
  %s6 = ssub.s32 1, %s4
  %s7 = scalar_select 0, %s6, %s4
  $region1: #{tpu_custom_call.1} parent=0
    #allocation2 [shape = 'u8[32768]{0}', space=vmem, size = 0x8000, scoped, tag = 'output window, operand 0, single buffered']
    #allocation3 [shape = 's32[1]{0}', space=sflag, size = 0x4, scoped, tag = 'scoped memory for tpu_custom_call.1']
    %8 = vsyncpa [#allocation3], 0
    // Predicated region
    $region2: #{tpu_custom_call.1} parent=1 // pred_check
      _
    $region3: #{tpu_custom_call.1} parent=1 // pred_check_branch
      %10 = sbr.rel (0) target = $region5
    $region4: #{tpu_custom_call.1} parent=1 // pred_region
      _
    $region5: #{tpu_custom_call.1} parent=1 // pred_fallthru
      _
    // Predicated region
    $region6: #{tpu_custom_call.1} parent=1 // pred_check
      _
    $region7: #{tpu_custom_call.1} parent=1 // pred_check_branch
      %12 = sbr.rel (0) target = $region9
    $region8: #{tpu_custom_call.1} parent=1 // pred_region
      _
    $region9: #{tpu_custom_call.1} parent=1 // pred_fallthru
      _
    // Predicated region
    $region10: #{tpu_custom_call.1} parent=1 // pred_check
      _
    $region11: #{tpu_custom_call.1} parent=1 // pred_check_branch
      %14 = sbr.rel (0) target = $region13
    $region12: #{tpu_custom_call.1} parent=1 // pred_region
      _
    $region13: #{tpu_custom_call.1} parent=1 // pred_fallthru
      _
    %v16 = vld [vmem:[%s0] sm:$0xff]
    %v17 = vld [vmem:[%s0 + $0x8] sm:$0xff]
    %v18 = vld [vmem:[%s0 + $0x10] sm:$0xff]
    %v19 = vld [vmem:[%s0 + $0x18] sm:$0xff]
    %v20 = vld [vmem:[%s0 + $0x20] sm:$0xff]
    %v21 = vld [vmem:[%s0 + $0x28] sm:$0xff]
    %v22 = vld [vmem:[%s0 + $0x30] sm:$0xff]
    %v23 = vld [vmem:[%s0 + $0x38] sm:$0xff]
    %v24 = vld [vmem:[%s0 + $0x40] sm:$0xff]
    %v25 = vld [vmem:[%s0 + $0x48] sm:$0xff]
    %v26 = vld [vmem:[%s0 + $0x50] sm:$0xff]
    %v27 = vld [vmem:[%s0 + $0x58] sm:$0xff]
    %v28 = vld [vmem:[%s0 + $0x60] sm:$0xff]
    %v29 = vld [vmem:[%s0 + $0x68] sm:$0xff]
    %v30 = vld [vmem:[%s0 + $0x70] sm:$0xff]
    %v31 = vld [vmem:[%s0 + $0x78] sm:$0xff]
    %v32 = vpack.c.bf16 %v17, %v16
    %v33 = vpack.c.bf16 %v19, %v18
    %v34 = vpack.c.bf16 %v21, %v20
    %v35 = vpack.c.bf16 %v23, %v22
    %v36 = vpack.c.bf16 %v25, %v24
    %v37 = vpack.c.bf16 %v27, %v26
    %v38 = vpack.c.bf16 %v29, %v28
    %v39 = vpack.c.bf16 %v31, %v30
    %v40 = vld [vmem:[%s1] sm:$0xf]
    %v41 = vld [vmem:[%s1 + $0x4] sm:$0xf]
    %v42 = vld [vmem:[%s1 + $0x8] sm:$0xf]
    %v43 = vld [vmem:[%s1 + $0xc] sm:$0xf]
    %v44 = vld [vmem:[%s2] sm:$0x1]
    %v46 = vperm.slane %v44, 0
    %v52 = vunpack.c.l.b16 %v40
    %v53 = vunpack.c.l.b16 %v41
    %v54 = vunpack.c.l.b16 %v42
    %v55 = vunpack.c.l.b16 %v43
    %v56 = vpack.c.b16 %v53, %v52
    %v57 = vpack.c.b16 %v55, %v54
    %vm60 = vcmask 261120
    %v62 = vsel %vm60, %v32, 0
    %v65 = vsel %vm60, %v33, 0
    %v68 = vsel %vm60, %v34, 0
    %v71 = vsel %vm60, %v35, 0
    %v74 = vsel %vm60, %v36, 0
    %v77 = vsel %vm60, %v37, 0
    %v80 = vsel %vm60, %v38, 0
    %v83 = vsel %vm60, %v39, 0
    %85 = vmatpush.bf16.msra.mxu0 0
    %86 = vmatpush.bf16.msra.mxu0 0
    %87 = vmatpush.bf16.msra.mxu0 0
    %88 = vmatpush.bf16.msra.mxu0 0
    %89 = vmatpush.bf16.msra.mxu0 0
    %90 = vmatpush.bf16.msra.mxu0 0
    %91 = vmatpush.bf16.msra.mxu0 %v57
    %92 = vmatpush.bf16.msra.mxu0 %v56
    %93 = vmatmul.bf16.gmra.mxu0 %v62
    %v94 = vpop.f32.mrf.mxu0
    %v95 = vadd.f32 %v46, %v94
    %v96 = vpop.f32.mrf.mxu0
    %v97 = vadd.f32 %v46, %v96
    %98 = vmatmul.bf16.gmra.mxu0 %v65
    %v99 = vpop.f32.mrf.mxu0
    %v100 = vadd.f32 %v46, %v99
    %v101 = vpop.f32.mrf.mxu0
    %v102 = vadd.f32 %v46, %v101
    %103 = vmatmul.bf16.gmra.mxu0 %v68
    %v104 = vpop.f32.mrf.mxu0
    %v105 = vadd.f32 %v46, %v104
    %v106 = vpop.f32.mrf.mxu0
    %v107 = vadd.f32 %v46, %v106
    %108 = vmatmul.bf16.gmra.mxu0 %v71
    %v109 = vpop.f32.mrf.mxu0
    %v110 = vadd.f32 %v46, %v109
    %v111 = vpop.f32.mrf.mxu0
    %v112 = vadd.f32 %v46, %v111
    %113 = vmatmul.bf16.gmra.mxu0 %v74
    %v114 = vpop.f32.mrf.mxu0
    %v115 = vadd.f32 %v46, %v114
    %v116 = vpop.f32.mrf.mxu0
    %v117 = vadd.f32 %v46, %v116
    %118 = vmatmul.bf16.gmra.mxu0 %v77
    %v119 = vpop.f32.mrf.mxu0
    %v120 = vadd.f32 %v46, %v119
    %v121 = vpop.f32.mrf.mxu0
    %v122 = vadd.f32 %v46, %v121
    %123 = vmatmul.bf16.gmra.mxu0 %v80
    %v124 = vpop.f32.mrf.mxu0
    %v125 = vadd.f32 %v46, %v124
    %v126 = vpop.f32.mrf.mxu0
    %v127 = vadd.f32 %v46, %v126
    %128 = vmatmul.bf16.gmra.mxu0 %v83
    %v129 = vpop.f32.mrf.mxu0
    %v130 = vadd.f32 %v46, %v129
    %v131 = vpop.f32.mrf.mxu0
    %v132 = vadd.f32 %v46, %v131
    %133 = vdwg.mxu0
    %v134 = vpack.c.bf16 %v95, %v95
    %v135 = vpack.c.bf16 %v97, %v97
    %v136 = vpack.c.bf16 %v100, %v100
    %v137 = vpack.c.bf16 %v102, %v102
    %v138 = vpack.c.bf16 %v105, %v105
    %v139 = vpack.c.bf16 %v107, %v107
    %v140 = vpack.c.bf16 %v110, %v110
    %v141 = vpack.c.bf16 %v112, %v112
    %v142 = vpack.c.bf16 %v115, %v115
    %v143 = vpack.c.bf16 %v117, %v117
    %v144 = vpack.c.bf16 %v120, %v120
    %v145 = vpack.c.bf16 %v122, %v122
    %v146 = vpack.c.bf16 %v125, %v125
    %v147 = vpack.c.bf16 %v127, %v127
    %v148 = vpack.c.bf16 %v130, %v130
    %v149 = vpack.c.bf16 %v132, %v132
    %150 = vst [vmem:[#allocation2] sm:$0xf] %v134
    %151 = vst [vmem:[#allocation2 + $0x4] sm:$0xf] %v135
    %152 = vst [vmem:[#allocation2 + $0x8] sm:$0xf] %v136
    %153 = vst [vmem:[#allocation2 + $0xc] sm:$0xf] %v137
    %154 = vst [vmem:[#allocation2 + $0x10] sm:$0xf] %v138
    %155 = vst [vmem:[#allocation2 + $0x14] sm:$0xf] %v139
    %156 = vst [vmem:[#allocation2 + $0x18] sm:$0xf] %v140
    %157 = vst [vmem:[#allocation2 + $0x1c] sm:$0xf] %v141
    %158 = vst [vmem:[#allocation2 + $0x20] sm:$0xf] %v142
    %159 = vst [vmem:[#allocation2 + $0x24] sm:$0xf] %v143
    %160 = vst [vmem:[#allocation2 + $0x28] sm:$0xf] %v144
    %161 = vst [vmem:[#allocation2 + $0x2c] sm:$0xf] %v145
    %162 = vst [vmem:[#allocation2 + $0x30] sm:$0xf] %v146
    %163 = vst [vmem:[#allocation2 + $0x34] sm:$0xf] %v147
    %164 = vst [vmem:[#allocation2 + $0x38] sm:$0xf] %v148
    %165 = vst [vmem:[#allocation2 + $0x3c] sm:$0xf] %v149
    // Predicated region
    $region14: #{tpu_custom_call.1} parent=1 // pred_check
      _
    $region15: #{tpu_custom_call.1} parent=1 // pred_check_branch
      %167 = sbr.rel (0) target = $region17
    $region16: #{tpu_custom_call.1} parent=1 // pred_region
      %169 = vsyncadd [#allocation3], 0
      %s170 = sshll.u32 [#allocation2], 4
      %s171 = int_to_ptr.vmem [resolvable:$true] %s170
      %s172 = sshll.u32 %s3, 4
      %s173 = int_to_ptr.hbm [resolvable:$true] %s172
      %178 = dma.vmem_to_hbm [thread:$0]  %s171, 1024, %s173, [#allocation3], 64, 64, 4
    $region17: #{tpu_custom_call.1} parent=1 // pred_fallthru
      _
    // Predicated region
    $region18: #{tpu_custom_call.1} parent=1 // pred_check
      _
    $region19: #{tpu_custom_call.1} parent=1 // pred_check_branch
      %180 = sbr.rel (0) target = $region21
    $region20: #{tpu_custom_call.1} parent=1 // pred_region
      %182 = dma.done [#allocation3], 1024
    $region21: #{tpu_custom_call.1} parent=1 // pred_fallthru
      _
    %183 = vsyncpa [#allocation3], 1

</llo_original>
